<compile_context>
chip_gen: v7x
topology: tpu7x:2x2x1
jax: 0.10.0
libtpu: 0.0.40
codegen_flags: <defaults>
</compile_context>

<pallas_src>
import functools

import jax
import jax.numpy as jnp
from jax import lax
from jax.experimental import pallas as pl
from jax.experimental.pallas import tpu as pltpu

BN_EPS = 1e-5


def _round_up(x: int, m: int) -> int:
    return ((x + m - 1) // m) * m


def _vmem_budget_bytes() -> int:
    # Generation-aware VMEM budget: ~75% of physical capacity, capped at
    # 100 MiB (headroom for compiler-internal scratch on 128 MiB chips).
    try:
        cap = pltpu.get_tpu_info().vmem_capacity_bytes
    except Exception:
        cap = 64 << 20  # conservative fallback (v7x-sized)
    return int(min(cap * 3 // 4, 100 << 20))


def _footprint_bytes(n_pad, tile_k, tile_n, w_bufs, use_acc):
    # bf16 x / W^T inputs (pipelined buffers), f32 gamma/beta + output, f32 acc.
    x_b = 2 * n_pad * tile_k * 2
    w_b = w_bufs * tile_k * tile_n * 2
    gb_b = 2 * 2 * tile_n * 4
    o_b = 2 * n_pad * tile_n * 4
    acc_b = n_pad * tile_n * 4 if use_acc else 0
    return x_b + w_b + gb_b + o_b + acc_b


def _choose_tiles(n_pad, in_c_pad, out_c_pad, budget, use_acc):
    # tile_n: 128-multiple divisors of out_c_pad (<= 512); prefer >= 2 j tiles
    # so the "parallel" axis can shard across the 2 TensorCores of a v7x chip.
    tn_cands = [t for t in (512, 256, 128) if out_c_pad % t == 0]
    tn_pref = [t for t in tn_cands if out_c_pad // t >= 2]
    tn_order = tn_pref if tn_pref else tn_cands
    # tile_k: maximize first -> prefer the full padded K (single reduction step,
    # no accumulator read-modify-write passes); fall back to smaller divisors.
    tk_order = [in_c_pad] + [t for t in (4096, 2048, 1024, 512, 256, 128)
                             if in_c_pad % t == 0 and t < in_c_pad]
    for tk in tk_order:          # maximize tile_k first
        for tn in tn_order:
            if _footprint_bytes(n_pad, tk, tn, 2, use_acc) <= budget:
                return tk, tn
    # TODO(synk): nothing fits the VMEM budget -> needs the N-streaming
    # fallback; return the smallest tiles and let compilation report it.
    return 128, 128


def _bn_relu_epilogue(y, gamma, beta, inv_n):
    """Fused BatchNorm1d (training-mode batch stats) + affine + ReLU.

    One-pass stats: sum and sum-of-squares in a single traversal of the tile.
    Zero-padded batch rows do not perturb the sums; dividing by the *real*
    batch size keeps mean/var exact.  max(var, 0) guards against f32
    cancellation in E[y^2] - E[y]^2.
    """
    s = jnp.sum(y, axis=0, keepdims=True)
    sq = jnp.sum(y * y, axis=0, keepdims=True)
    mean = s * inv_n
    var = jnp.maximum(sq * inv_n - mean * mean, 0.0)
    inv_std = lax.rsqrt(var + BN_EPS)                       # EUP slot
    # NOTE: gamma is zero-padded, so padded output columns get scale = 0 and
    # shift = 0 -> exactly 0 (they are sliced off anyway).  Do not pad w/ ones.
    scale = gamma * inv_std
    shift = beta - mean * scale
    return jnp.maximum(y * scale + shift, 0.0)


def _kernel_f32_out(x_ref, wt_ref, gamma_ref, beta_ref, o_ref, *, inv_n):
    # f32 output: accumulate the matmul directly into o_ref (no acc scratch).
    k = pl.program_id(1)
    part = jnp.dot(x_ref[...], wt_ref[...], preferred_element_type=jnp.float32)

    @pl.when(k == 0)
    def _init():
        o_ref[...] = part

    @pl.when(k > 0)
    def _accum():
        o_ref[...] += part

    @pl.when(k == pl.num_programs(1) - 1)
    def _finalize():
        o_ref[...] = _bn_relu_epilogue(
            o_ref[...], gamma_ref[...], beta_ref[...], inv_n)


def _kernel_acc_out(x_ref, wt_ref, gamma_ref, beta_ref, o_ref, acc_ref, *, inv_n):
    # Non-f32 output: f32 VMEM accumulator, cast once in the epilogue.
    k = pl.program_id(1)
    part = jnp.dot(x_ref[...], wt_ref[...], preferred_element_type=jnp.float32)

    @pl.when(k == 0)
    def _init():
        acc_ref[...] = part

    @pl.when(k > 0)
    def _accum():
        acc_ref[...] += part

    @pl.when(k == pl.num_programs(1) - 1)
    def _finalize():
        o_ref[...] = _bn_relu_epilogue(
            acc_ref[...], gamma_ref[...], beta_ref[...], inv_n
        ).astype(o_ref.dtype)


def prepare_linear_bn_act_params(w, gamma, beta):
    """One-time weight prep (hoisted off the per-call hot path).

    w: (out_c, in_c) in PyTorch nn.Linear layout.  Returns W^T cast to bf16 and
    zero-padded to (in_c_pad, out_c_pad), plus zero-padded f32 gamma/beta rows.
    """
    out_c, in_c = w.shape
    in_c_pad = _round_up(in_c, 128)
    out_c_pad = _round_up(out_c, 128)
    wt = jnp.zeros((in_c_pad, out_c_pad), jnp.bfloat16)
    wt = wt.at[:in_c, :out_c].set(w.T.astype(jnp.bfloat16))
    gp = jnp.zeros((1, out_c_pad), jnp.float32).at[0, :out_c].set(
        gamma.astype(jnp.float32))
    bp = jnp.zeros((1, out_c_pad), jnp.float32).at[0, :out_c].set(
        beta.astype(jnp.float32))
    return wt, gp, bp, (in_c, out_c)


@functools.partial(jax.jit, static_argnames=("orig_dims",))
def linear_bn_act(x, wt, gp, bp, orig_dims):
    """x: (N, in_c); wt/gp/bp/orig_dims from prepare_linear_bn_act_params."""
    in_c, out_c = orig_dims
    N = x.shape[0]
    in_c_pad, out_c_pad = wt.shape
    out_dtype = x.dtype
    use_acc = out_dtype != jnp.float32

    # Zero-pad x: K to in_c_pad, N to a multiple of 16 (clean bf16 sublane
    # layout).  Zero rows/cols contribute nothing to the matmul and the BN
    # sums divide by the real N, so the batch statistics stay exact.
    n_pad = _round_up(max(N, 16), 16)
    xp = jnp.zeros((n_pad, in_c_pad), jnp.bfloat16)
    xp = xp.at[:N, :in_c].set(x.astype(jnp.bfloat16))

    budget = _vmem_budget_bytes()
    tile_k, tile_n = _choose_tiles(n_pad, in_c_pad, out_c_pad, budget, use_acc)
    num_j = out_c_pad // tile_n
    num_k = in_c_pad // tile_k
    grid = (num_j, num_k)

    # Deepen the W^T pipeline (the only operand changing on every grid step)
    # when there are enough steps and VMEM headroom: weight-BW-bound small-N
    # case on v5e/v6e.
    w_bufs = 3 if (num_j * num_k >= 3 and
                   _footprint_bytes(n_pad, tile_k, tile_n, 3, use_acc) <= budget) else 2
    if w_bufs == 3:
        wt_spec = pl.BlockSpec((tile_k, tile_n), lambda j, k: (k, j),
                               pipeline_mode=pl.Buffered(3))
    else:
        wt_spec = pl.BlockSpec((tile_k, tile_n), lambda j, k: (k, j))

    vmem_limit = int(min(budget,
                         _footprint_bytes(n_pad, tile_k, tile_n, w_bufs, use_acc)
                         + (8 << 20)))
    vmem_limit = max(vmem_limit, 16 << 20)

    # With num_k == 1 the x block index is constant over the grid -> fetched
    # once; otherwise x is re-streamed once per output-column tile.
    x_reads = 1 if num_k == 1 else num_j
    cost = pl.CostEstimate(
        flops=2 * n_pad * in_c_pad * out_c_pad,
        transcendentals=out_c_pad,
        bytes_accessed=(2 * n_pad * in_c_pad * x_reads        # bf16 x
                        + 2 * in_c_pad * out_c_pad            # bf16 W^T
                        + 4 * n_pad * out_c_pad               # f32 out
                        + 2 * 4 * out_c_pad * num_j),         # gamma/beta
    )

    inv_n = 1.0 / N
    if use_acc:
        kernel = functools.partial(_kernel_acc_out, inv_n=inv_n)
        scratch = [pltpu.VMEM((n_pad, tile_n), jnp.float32)]
    else:
        kernel = functools.partial(_kernel_f32_out, inv_n=inv_n)
        scratch = []

    out_pad = pl.pallas_call(
        kernel,
        out_shape=jax.ShapeDtypeStruct((n_pad, out_c_pad), out_dtype),
        grid_spec=pltpu.PrefetchScalarGridSpec(
            num_scalar_prefetch=0,
            grid=grid,
            in_specs=[
                pl.BlockSpec((n_pad, tile_k), lambda j, k: (0, k)),   # x (bf16)
                wt_spec,                                              # W^T (bf16)
                pl.BlockSpec((1, tile_n), lambda j, k: (0, j)),       # gamma
                pl.BlockSpec((1, tile_n), lambda j, k: (0, j)),       # beta
            ],
            out_specs=pl.BlockSpec((n_pad, tile_n), lambda j, k: (0, j)),
            scratch_shapes=scratch,
        ),
        compiler_params=pltpu.CompilerParams(
            dimension_semantics=("parallel", "arbitrary"),
            vmem_limit_bytes=vmem_limit,
        ),
        cost_estimate=cost,
    )(xp, wt, gp, bp)

    return out_pad[:N, :out_c]


def reference(x, w, gamma, beta):
    y = x @ w.T
    mean = jnp.mean(y, axis=0, keepdims=True)
    var = jnp.mean((y - mean) ** 2, axis=0, keepdims=True)
    y_hat = (y - mean) / jnp.sqrt(var + BN_EPS)
    return jnp.maximum(y_hat * gamma[None, :] + beta[None, :], 0.0)


if __name__ == "__main__":
    N, IN_C, OUT_C = 8, 32, 64

    key = jax.random.PRNGKey(0)
    kx, kw, kg, kb = jax.random.split(key, 4)

    x = jax.random.normal(kx, (N, IN_C), dtype=jnp.float32)
    # nn.Linear-style init (uniform in +/- 1/sqrt(in_c)); no bias (bn=True).
    bound = 1.0 / (IN_C ** 0.5)
    w = jax.random.uniform(kw, (OUT_C, IN_C), minval=-bound, maxval=bound,
                           dtype=jnp.float32)
    # Non-trivial affine params to exercise the fused scale/shift path.
    gamma = 1.0 + 0.1 * jax.random.normal(kg, (OUT_C,), dtype=jnp.float32)
    beta = 0.1 * jax.random.normal(kb, (OUT_C,), dtype=jnp.float32)

    # One-time weight prep (transpose + pad + bf16 cast), off the hot path.
    wt, gp, bp, dims = prepare_linear_bn_act_params(w, gamma, beta)

    out = linear_bn_act(x, wt, gp, bp, dims)
    out = jax.block_until_ready(out)
    assert out.shape == (N, OUT_C)

    # Tight check against a reference that uses the same bf16 input precision
    # as the MXU path (BN / epilogue math is f32 in both).
    x_bf = x.astype(jnp.bfloat16).astype(jnp.float32)
    w_bf = w.astype(jnp.bfloat16).astype(jnp.float32)
    ref_bf16 = reference(x_bf, w_bf, gamma, beta)
    assert jnp.allclose(out, ref_bf16, atol=1e-3, rtol=1e-3), \
        "mismatch vs bf16-consistent reference"

    # Loose check against the full-f32 PyTorch-semantics reference; the
    # tolerance accounts for feeding the MXU bf16 inputs.
    ref_f32 = reference(x, w, gamma, beta)
    assert jnp.allclose(out, ref_f32, atol=5e-2, rtol=5e-2), \
        "mismatch vs f32 reference"

    print("KERNEL_OK")
</pallas_src>

<mosaic_0001>
module attributes {stable_mosaic.version = 11 : i64} {
  func.func @_kernel_f32_out(%arg0: i32, %arg1: i32, %arg2: memref<16x128xbf16, #tpu.memory_space<vmem>>, %arg3: memref<128x128xbf16, #tpu.memory_space<vmem>>, %arg4: memref<1x128xf32, #tpu.memory_space<vmem>>, %arg5: memref<1x128xf32, #tpu.memory_space<vmem>>, %arg6: memref<16x128xf32, #tpu.memory_space<vmem>>) attributes {dimension_semantics = [#tpu.dimension_semantics<parallel>, #tpu.dimension_semantics<arbitrary>], iteration_bounds = array<i64: 1, 1>, scalar_prefetch = 0 : i64, scratch_operands = 0 : i64, tpu.core_type = #tpu.core_type<tc>, window_params = [{transform_indices = @transform_0, window_bounds = array<i64: 16, 128>}, {transform_indices = @transform_1, window_bounds = array<i64: 128, 128>}, {transform_indices = @transform_2, window_bounds = array<i64: 1, 128>}, {transform_indices = @transform_3, window_bounds = array<i64: 1, 128>}, {transform_indices = @transform_4, window_bounds = array<i64: 16, 128>}]} {
    %c0 = arith.constant 0 : index
    %c0_0 = arith.constant 0 : index
    %0 = vector.load %arg2[%c0, %c0_0] : memref<16x128xbf16, #tpu.memory_space<vmem>>, vector<16x128xbf16>
    %c0_1 = arith.constant 0 : index
    %c0_2 = arith.constant 0 : index
    %1 = vector.load %arg3[%c0_1, %c0_2] : memref<128x128xbf16, #tpu.memory_space<vmem>>, vector<128x128xbf16>
    %cst = arith.constant dense<0.000000e+00> : vector<16x128xf32>
    %2 = tpu.matmul %0, %1, %cst {dimension_numbers = #tpu.dot_dimension_numbers<[1], [0], [0], [1], [0, 0, 1, 1], [], []>} : vector<16x128xbf16>, vector<128x128xbf16>, vector<16x128xf32> -> vector<16x128xf32>
    %c0_i32 = arith.constant 0 : i32
    %3 = arith.cmpi eq, %arg1, %c0_i32 : i32
    %4 = arith.extui %3 : i1 to i32
    %c0_i32_3 = arith.constant 0 : i32
    %5 = arith.cmpi ne, %4, %c0_i32_3 : i32
    scf.if %5 {
      %c0_8 = arith.constant 0 : index
      %c0_9 = arith.constant 0 : index
      %12 = vector.load %arg6[%c0_8, %c0_9] : memref<16x128xf32, #tpu.memory_space<vmem>>, vector<16x128xf32>
      tpu.vector_store %arg6[%c0_8, %c0_9], %2 {strides = array<i32>} : memref<16x128xf32, #tpu.memory_space<vmem>>, vector<16x128xf32>,
    } else {
    }
    %c0_i32_4 = arith.constant 0 : i32
    %6 = arith.cmpi sgt, %arg1, %c0_i32_4 : i32
    %7 = arith.extui %6 : i1 to i32
    %c0_i32_5 = arith.constant 0 : i32
    %8 = arith.cmpi ne, %7, %c0_i32_5 : i32
    scf.if %8 {
      %c0_8 = arith.constant 0 : index
      %c0_9 = arith.constant 0 : index
      %12 = vector.load %arg6[%c0_8, %c0_9] : memref<16x128xf32, #tpu.memory_space<vmem>>, vector<16x128xf32>
      %13 = arith.addf %12, %2 : vector<16x128xf32>
      %c0_10 = arith.constant 0 : index
      %c0_11 = arith.constant 0 : index
      %14 = vector.load %arg6[%c0_10, %c0_11] : memref<16x128xf32, #tpu.memory_space<vmem>>, vector<16x128xf32>
      tpu.vector_store %arg6[%c0_10, %c0_11], %13 {strides = array<i32>} : memref<16x128xf32, #tpu.memory_space<vmem>>, vector<16x128xf32>,
    } else {
    }
    %c0_i32_6 = arith.constant 0 : i32
    %9 = arith.cmpi eq, %arg1, %c0_i32_6 : i32
    %10 = arith.extui %9 : i1 to i32
    %c0_i32_7 = arith.constant 0 : i32
    %11 = arith.cmpi ne, %10, %c0_i32_7 : i32
    scf.if %11 {
      %c0_8 = arith.constant 0 : index
      %c0_9 = arith.constant 0 : index
      %12 = vector.load %arg6[%c0_8, %c0_9] : memref<16x128xf32, #tpu.memory_space<vmem>>, vector<16x128xf32>
      %c0_10 = arith.constant 0 : index
      %c0_11 = arith.constant 0 : index
      %13 = vector.load %arg4[%c0_10, %c0_11] : memref<1x128xf32, #tpu.memory_space<vmem>>, vector<1x128xf32>
      %c0_12 = arith.constant 0 : index
      %c0_13 = arith.constant 0 : index
      %14 = vector.load %arg5[%c0_12, %c0_13] : memref<1x128xf32, #tpu.memory_space<vmem>>, vector<1x128xf32>
      %cst_14 = arith.constant dense<0.000000e+00> : vector<128xf32>
      %15 = vector.multi_reduction <add>, %12, %cst_14 [0] : vector<16x128xf32> to vector<128xf32>
      %16 = vector.shape_cast %15 : vector<128xf32> to vector<1x128xf32>
      %17 = arith.mulf %12, %12 : vector<16x128xf32>
      %cst_15 = arith.constant dense<0.000000e+00> : vector<128xf32>
      %18 = vector.multi_reduction <add>, %17, %cst_15 [0] : vector<16x128xf32> to vector<128xf32>
      %19 = vector.shape_cast %18 : vector<128xf32> to vector<1x128xf32>
      %cst_16 = arith.constant 1.250000e-01 : f32
      %20 = vector.broadcast %cst_16 : f32 to vector<1x128xf32>
      %21 = arith.mulf %16, %20 : vector<1x128xf32>
      %cst_17 = arith.constant 1.250000e-01 : f32
      %22 = vector.broadcast %cst_17 : f32 to vector<1x128xf32>
      %23 = arith.mulf %19, %22 : vector<1x128xf32>
      %24 = arith.mulf %21, %21 : vector<1x128xf32>
      %25 = arith.subf %23, %24 : vector<1x128xf32>
      %cst_18 = arith.constant 0.000000e+00 : f32
      %26 = vector.broadcast %cst_18 : f32 to vector<1x128xf32>
      %27 = arith.maximumf %25, %26 : vector<1x128xf32>
      %cst_19 = arith.constant 9.99999974E-6 : f32
      %28 = vector.broadcast %cst_19 : f32 to vector<1x128xf32>
      %29 = arith.addf %27, %28 : vector<1x128xf32>
      %30 = math.rsqrt %29 : vector<1x128xf32>
      %31 = arith.mulf %13, %30 : vector<1x128xf32>
      %32 = arith.mulf %21, %31 : vector<1x128xf32>
      %33 = arith.subf %14, %32 : vector<1x128xf32>
      %34 = vector.broadcast %31 : vector<1x128xf32> to vector<16x128xf32>
      %35 = arith.mulf %12, %34 : vector<16x128xf32>
      %36 = vector.broadcast %33 : vector<1x128xf32> to vector<16x128xf32>
      %37 = arith.addf %35, %36 : vector<16x128xf32>
      %cst_20 = arith.constant 0.000000e+00 : f32
      %38 = vector.broadcast %cst_20 : f32 to vector<16x128xf32>
      %39 = arith.maximumf %37, %38 : vector<16x128xf32>
      %c0_21 = arith.constant 0 : index
      %c0_22 = arith.constant 0 : index
      %40 = vector.load %arg6[%c0_21, %c0_22] : memref<16x128xf32, #tpu.memory_space<vmem>>, vector<16x128xf32>
      tpu.vector_store %arg6[%c0_21, %c0_22], %39 {strides = array<i32>} : memref<16x128xf32, #tpu.memory_space<vmem>>, vector<16x128xf32>,
    } else {
    }
    return
  }
  func.func @transform_0(%arg0: i32, %arg1: i32) -> (i32, i32) {
    %c0_i32 = arith.constant 0 : i32
    %c0_i32_0 = arith.constant 0 : i32
    return %c0_i32, %arg1 : i32, i32
  }
  func.func @transform_1(%arg0: i32, %arg1: i32) -> (i32, i32) {
    %c0_i32 = arith.constant 0 : i32
    return %arg1, %arg0 : i32, i32
  }
  func.func @transform_2(%arg0: i32, %arg1: i32) -> (i32, i32) {
    %c0_i32 = arith.constant 0 : i32
    %c0_i32_0 = arith.constant 0 : i32
    return %c0_i32, %arg0 : i32, i32
  }
  func.func @transform_3(%arg0: i32, %arg1: i32) -> (i32, i32) {
    %c0_i32 = arith.constant 0 : i32
    %c0_i32_0 = arith.constant 0 : i32
    return %c0_i32, %arg0 : i32, i32
  }
  func.func @transform_4(%arg0: i32, %arg1: i32) -> (i32, i32) {
    %c0_i32 = arith.constant 0 : i32
    %c0_i32_0 = arith.constant 0 : i32
    return %c0_i32, %arg0 : i32, i32
  }
}

</mosaic_0001>

<llo_original>
// kernel: linear_bn_act.1
$region0: #{linear_bn_act.1}
  #allocation0 [shape = 'u32[]', space=smem, size = 0x4, offset = 0x4, fixed_abs, tag = 'smem constant byte address 0x4 - core index']
  #allocation1 [shape = 'u32[144,128]{1,0:T(1,128)}', space=vmem, size = 0x12000, scoped, tag = 'internal scratch']
  %s0 = inlined_call_operand.vmem [shape: bf16[16,128], index: 0, kind: input, shape index: {}]
  %s1 = inlined_call_operand.hbm [shape: bf16[128,128], index: 1, kind: input, shape index: {}]
  %s2 = inlined_call_operand.vmem [shape: f32[1,128], index: 2, kind: input, shape index: {}]
  %s3 = inlined_call_operand.vmem [shape: f32[1,128], index: 3, kind: input, shape index: {}]
  %s4 = inlined_call_operand.vmem [shape: f32[16,128], index: 4, kind: output, shape index: {}]
  %s5 = sld [smem:[#allocation0]]
  $region42: #{linear_bn_act.1} parent=0
    _
  %s7 = ssub.s32 1, %s5
  %s8 = scalar_select 0, %s7, %s5
  $region1: #{linear_bn_act.1} parent=0
    #allocation2 [shape = 'u8[32768]{0}', space=vmem, size = 0x8000, scoped, tag = 'input window, operand 1, single buffered']
    #allocation3 [shape = 's32[1]{0}', space=sflag, size = 0x4, scoped, tag = 'scoped memory for linear_bn_act.1']
    %9 = vsyncpa [#allocation3], 0
    // Predicated region
    $region2: #{linear_bn_act.1} parent=1 // pred_check
      _
    $region3: #{linear_bn_act.1} parent=1 // pred_check_branch
      %11 = sbr.rel (0) target = $region5
    $region4: #{linear_bn_act.1} parent=1 // pred_region
      _
    $region5: #{linear_bn_act.1} parent=1 // pred_fallthru
      _
    // Predicated region
    $region6: #{linear_bn_act.1} parent=1 // pred_check
      _
    $region7: #{linear_bn_act.1} parent=1 // pred_check_branch
      %13 = sbr.rel (0) target = $region9
    $region8: #{linear_bn_act.1} parent=1 // pred_region
      %s15 = ssub.s32 1024, 1024
      %16 = vsyncadd [#allocation3], %s15
      %s17 = sshll.u32 [#allocation2], 4
      %s18 = int_to_ptr.vmem [resolvable:$true] %s17
      %23 = dma.hbm_to_vmem [thread:$0]  %s1, 1024, %s18, [#allocation3], 64, 64, 4
    $region9: #{linear_bn_act.1} parent=1 // pred_fallthru
      _
    // Predicated region
    $region10: #{linear_bn_act.1} parent=1 // pred_check
      _
    $region11: #{linear_bn_act.1} parent=1 // pred_check_branch
      %25 = sbr.rel (0) target = $region13
    $region12: #{linear_bn_act.1} parent=1 // pred_region
      _
    $region13: #{linear_bn_act.1} parent=1 // pred_fallthru
      _
    // Predicated region
    $region14: #{linear_bn_act.1} parent=1 // pred_check
      _
    $region15: #{linear_bn_act.1} parent=1 // pred_check_branch
      %27 = sbr.rel (0) target = $region17
    $region16: #{linear_bn_act.1} parent=1 // pred_region
      _
    $region17: #{linear_bn_act.1} parent=1 // pred_fallthru
      _
    // Predicated region
    $region18: #{linear_bn_act.1} parent=1 // pred_check
      _
    $region19: #{linear_bn_act.1} parent=1 // pred_check_branch
      %29 = sbr.rel (0) target = $region21
    $region20: #{linear_bn_act.1} parent=1 // pred_region
      %30 = dma.done [#allocation3], 1024
    $region21: #{linear_bn_act.1} parent=1 // pred_fallthru
      _
    %v32 = vld [vmem:[%s0] sm:$0xf]
    %v33 = vld [vmem:[%s0 + $0x4] sm:$0xf]
    %v34 = vld [vmem:[#allocation2] sm:$0xf]
    %v35 = vld [vmem:[#allocation2 + $0x4] sm:$0xf]
    %v36 = vld [vmem:[#allocation2 + $0x8] sm:$0xf]
    %v37 = vld [vmem:[#allocation2 + $0xc] sm:$0xf]
    %v38 = vld [vmem:[#allocation2 + $0x10] sm:$0xf]
    %v39 = vld [vmem:[#allocation2 + $0x14] sm:$0xf]
    %v40 = vld [vmem:[#allocation2 + $0x18] sm:$0xf]
    %v41 = vld [vmem:[#allocation2 + $0x1c] sm:$0xf]
    %v42 = vld [vmem:[#allocation2 + $0x20] sm:$0xf]
    %v43 = vld [vmem:[#allocation2 + $0x24] sm:$0xf]
    %v44 = vld [vmem:[#allocation2 + $0x28] sm:$0xf]
    %v45 = vld [vmem:[#allocation2 + $0x2c] sm:$0xf]
    %v46 = vld [vmem:[#allocation2 + $0x30] sm:$0xf]
    %v47 = vld [vmem:[#allocation2 + $0x34] sm:$0xf]
    %v48 = vld [vmem:[#allocation2 + $0x38] sm:$0xf]
    %v49 = vld [vmem:[#allocation2 + $0x3c] sm:$0xf]
    %v52 = vunpack.c.l.b16 %v32
    %v53 = vunpack.c.l.b16 %v33
    %v54 = vpack.c.b16 %v53, %v52
    %v72 = vunpack.c.l.b16 %v34
    %v73 = vunpack.c.l.b16 %v35
    %v74 = vunpack.c.l.b16 %v36
    %v75 = vunpack.c.l.b16 %v37
    %v76 = vunpack.c.l.b16 %v38
    %v77 = vunpack.c.l.b16 %v39
    %v78 = vunpack.c.l.b16 %v40
    %v79 = vunpack.c.l.b16 %v41
    %v80 = vunpack.c.l.b16 %v42
    %v81 = vunpack.c.l.b16 %v43
    %v82 = vunpack.c.l.b16 %v44
    %v83 = vunpack.c.l.b16 %v45
    %v84 = vunpack.c.l.b16 %v46
    %v85 = vunpack.c.l.b16 %v47
    %v86 = vunpack.c.l.b16 %v48
    %v87 = vunpack.c.l.b16 %v49
    %v88 = vpack.c.b16 %v73, %v72
    %v89 = vpack.c.b16 %v75, %v74
    %v90 = vpack.c.b16 %v77, %v76
    %v91 = vpack.c.b16 %v79, %v78
    %v92 = vpack.c.b16 %v81, %v80
    %v93 = vpack.c.b16 %v83, %v82
    %v94 = vpack.c.b16 %v85, %v84
    %v95 = vpack.c.b16 %v87, %v86
    %104 = vmatprep.subr.bf16.mxu0 0
    %105 = vmatpush1.bf16.msra.mxu0 %v88
    %106 = vmatprep.subr.bf16.mxu0 0
    %107 = vmatpush1.bf16.msra.mxu0 %v89
    %108 = vmatprep.subr.bf16.mxu0 0
    %109 = vmatpush1.bf16.msra.mxu0 %v90
    %110 = vmatprep.subr.bf16.mxu0 0
    %111 = vmatpush1.bf16.msra.mxu0 %v91
    %112 = vmatprep.subr.bf16.mxu0 0
    %113 = vmatpush1.bf16.msra.mxu0 %v92
    %114 = vmatprep.subr.bf16.mxu0 0
    %115 = vmatpush1.bf16.msra.mxu0 %v93
    %116 = vmatprep.subr.bf16.mxu0 0
    %117 = vmatpush1.bf16.msra.mxu0 %v94
    %118 = vmatprep.subr.bf16.mxu0 0
    %119 = vmatpush1.bf16.msra.mxu0 %v95
    %120 = vmatprep.subr.bf16.mxu0 0
    %121 = vmatpush1.bf16.msra.mxu0 0
    %122 = vmatprep.subr.bf16.mxu0 0
    %123 = vmatpush1.bf16.msra.mxu0 0
    %124 = vmatprep.subr.bf16.mxu0 0
    %125 = vmatpush1.bf16.msra.mxu0 0
    %126 = vmatprep.subr.bf16.mxu0 0
    %127 = vmatpush1.bf16.msra.mxu0 0
    %128 = vmatprep.subr.bf16.mxu0 0
    %129 = vmatpush1.bf16.msra.mxu0 0
    %130 = vmatprep.subr.bf16.mxu0 0
    %131 = vmatpush1.bf16.msra.mxu0 0
    %132 = vmatprep.subr.bf16.mxu0 0
    %133 = vmatpush1.bf16.msra.mxu0 0
    %134 = vmatprep.subr.bf16.mxu0 0
    %135 = vmatpush1.bf16.msra.mxu0 0
    %136 = vmatprep.mubr.bf16.mxu0 0
    %137 = vmatmul.mubr.bf16.gmra.mrb[0].mxu0 %v54
    %v138 = vpop.f32.mrb[0].mxu0
    %v139 = vadd.f32 0.0, %v138
    %v140 = vpop.f32.mrb[0].mxu0
    %v141 = vpop.f32.mrb[0].mxu0
    %v142 = vadd.f32 0.0, %v141
    %v143 = vpop.f32.mrb[0].mxu0
    %144 = vdwg.mxu0
    %p145 = scmp.eq.s32.totalorder 0, 0
    // Predicated region
    $region22: #{linear_bn_act.1} parent=1 // pred_check
      %p146 = pneg %p145
    $region23: #{linear_bn_act.1} parent=1 // pred_check_branch
      %148 = sbr.rel (%p146) target = $region25
    $region24: #{linear_bn_act.1} parent=1 // pred_region
      %149 = vst [vmem:[%s4] sm:$0xff] %v139
      %150 = vst [vmem:[%s4 + $0x8] sm:$0xff] %v142
    $region25: #{linear_bn_act.1} parent=1 // pred_fallthru
      _
    %p151 = scmp.gt.s32.totalorder 0, 0
    // Predicated region
    $region26: #{linear_bn_act.1} parent=1 // pred_check
      %p152 = pneg %p151
    $region27: #{linear_bn_act.1} parent=1 // pred_check_branch
      %154 = sbr.rel (%p152) target = $region29
    $region28: #{linear_bn_act.1} parent=1 // pred_region
      %v155 = vld [vmem:[%s4] sm:$0xff]
      %v156 = vld [vmem:[%s4 + $0x8] sm:$0xff]
      %v157 = vadd.f32 %v155, %v139
      %v158 = vadd.f32 %v156, %v142
      %159 = vst [vmem:[%s4] sm:$0xff] %v157
      %160 = vst [vmem:[%s4 + $0x8] sm:$0xff] %v158
    $region29: #{linear_bn_act.1} parent=1 // pred_fallthru
      _
    // Predicated region
    $region30: #{linear_bn_act.1} parent=1 // pred_check
      %p161 = pneg %p145
    $region31: #{linear_bn_act.1} parent=1 // pred_check_branch
      %163 = sbr.rel (%p161) target = $region33
    $region32: #{linear_bn_act.1} parent=1 // pred_region
      %v164 = vld [vmem:[%s4] sm:$0xff]
      %v165 = vld [vmem:[%s4 + $0x8] sm:$0xff]
      %v166 = vld [vmem:[%s2] sm:$0x1]
      %v167 = vld [vmem:[%s3] sm:$0x1]
      %v168 = vadd.f32 %v164, %v165
      %v169 = vrot.slane %v168, 4
      %v170 = vadd.f32 %v168, %v169
      %v171 = vrot.slane %v170, 2
      %v172 = vadd.f32 %v170, %v171
      %v173 = vrot.slane %v172, 1
      %v174 = vadd.f32 %v172, %v173
      %v175 = vmul.f32 %v164, %v164
      %v176 = vmul.f32 %v165, %v165
      %v177 = vadd.f32 %v175, %v176
      %v178 = vrot.slane %v177, 4
      %v179 = vadd.f32 %v177, %v178
      %v180 = vrot.slane %v179, 2
      %v181 = vadd.f32 %v179, %v180
      %v182 = vrot.slane %v181, 1
      %v183 = vadd.f32 %v181, %v182
      %v184 = vmul.f32 %v174, 0.125
      %v185 = vmul.f32 %v183, 0.125
      %v186 = vmul.f32 %v184, %v184
      %v187 = vsub.f32 %v185, %v186
      %v188 = vmax.f32 %v187, 0.0
      %v189 = vadd.f32 %v188, 1e-05
      %v190 = vrsqrt.pop %v189
      %v191 = vmul.f32 %v166, %v190
      %v192 = vmul.f32 %v184, %v191
      %v193 = vsub.f32 %v167, %v192
      %v195 = vlaneseq
      %v196 = vshrl.u32 %v195, 7
      %v197 = vsub.s32 0, %v196
      %v198 = vrot.slane %v191, %v197
      %v200 = vmul.f32 %v164, %v198
      %v201 = vmul.f32 %v165, %v198
      %v203 = vlaneseq
      %v204 = vshrl.u32 %v203, 7
      %v205 = vsub.s32 0, %v204
      %v206 = vrot.slane %v193, %v205
      %v208 = vadd.f32 %v200, %v206
      %v209 = vadd.f32 %v201, %v206
      %v210 = vmax.f32 %v208, 0.0
      %v211 = vmax.f32 %v209, 0.0
      %212 = vst [vmem:[%s4] sm:$0xff] %v210
      %213 = vst [vmem:[%s4 + $0x8] sm:$0xff] %v211
    $region33: #{linear_bn_act.1} parent=1 // pred_fallthru
      _
    // Predicated region
    $region34: #{linear_bn_act.1} parent=1 // pred_check
      _
    $region35: #{linear_bn_act.1} parent=1 // pred_check_branch
      %215 = sbr.rel (0) target = $region37
    $region36: #{linear_bn_act.1} parent=1 // pred_region
      _
    $region37: #{linear_bn_act.1} parent=1 // pred_fallthru
      _
    // Predicated region
    $region38: #{linear_bn_act.1} parent=1 // pred_check
      _
    $region39: #{linear_bn_act.1} parent=1 // pred_check_branch
      %217 = sbr.rel (0) target = $region41
    $region40: #{linear_bn_act.1} parent=1 // pred_region
      _
    $region41: #{linear_bn_act.1} parent=1 // pred_fallthru
      _
    %218 = vsyncpa [#allocation3], 1

</llo_original>
